<compile_context>
chip_gen: v7x
topology: tpu7x:2x2x1
jax: 0.10.0
libtpu: 0.0.40
codegen_flags: <defaults>
</compile_context>

<pallas_src>
import functools

import jax
import jax.numpy as jnp
from jax.experimental import pallas as pl
from jax.experimental.pallas import tpu as pltpu


def _shuffle_kernel(x_ref, o_ref, *, groups, hw):
    # x_ref: (groups, c_chunk, hw)    -- `groups` contiguous input slabs
    # o_ref: (c_chunk, groups * hw)   -- one fully contiguous output slab
    # Interleave in VMEM.  The lane offsets g*hw may be 128-unaligned; the
    # compiler emits the lane shift + masked stores (XLU/vst slots), which are
    # free filler under the HBM-bound block DMA of this pure-copy kernel.
    for g in range(groups):
        o_ref[:, g * hw:(g + 1) * hw] = x_ref[g]


def _vmem_budget_bytes():
    """Generation-aware scoped-VMEM budget: v7x 64 MiB phys -> 48; v5e/v6e -> 96."""
    cap = 128 * 1024 * 1024
    try:
        cap = int(getattr(pltpu.get_tpu_info(), "vmem_capacity_bytes", cap))
    except Exception:
        pass
    return min((cap * 3) // 4, 96 * 1024 * 1024)


def _pick_c_chunk(cpg, groups, hw, itemsize, target_bytes):
    """Largest channel chunk whose (in or out) VMEM tile stays <= target_bytes.

    Returns a sublane-aligned divisor of cpg (or cpg itself, which is always a
    legal full-extent block), or None if even the smallest legal chunk would
    exceed the budget — the caller then falls back to the XLA reference.
    """
    hw_pad = pl.cdiv(hw, 128) * 128              # lane padding inside VMEM
    bytes_per_row = groups * hw_pad * itemsize   # VMEM bytes per unit of c_chunk
    sub = max(8, 32 // itemsize)                 # 8 sublanes f32, 16 bf16, 32 int8
    cands = [d for d in range(sub, cpg + 1, sub) if cpg % d == 0]
    if cpg not in cands:
        cands.append(cpg)                        # full extent is always layout-legal
    fitting = [d for d in cands if d * bytes_per_row <= target_bytes]
    if not fitting:
        return None
    return max(fitting)


def channel_shuffle_ref(x: jax.Array, groups: int) -> jax.Array:
    """Pure-JAX reference matching the PyTorch forward exactly."""
    B, C, H, W = x.shape
    cpg = C // groups
    y = x.reshape(B, groups, cpg, H, W)
    y = jnp.transpose(y, (0, 2, 1, 3, 4))
    return y.reshape(B, -1, H, W)


def channel_shuffle(x: jax.Array, groups: int, *, force_pallas: bool = False,
                    max_tile_bytes: int | None = None) -> jax.Array:
    """Pallas implementation of the ShuffleNet channel shuffle, NCHW layout."""
    B, C, H, W = x.shape
    assert C % groups == 0, "num_channels must be divisible by groups"
    if groups == 1:
        return x

    cpg = C // groups
    hw = H * W
    itemsize = jnp.dtype(x.dtype).itemsize

    # Small activations: XLA's fused transpose copy is already near roofline;
    # fixed pallas_call / pipeline overhead would dominate (worst on v7x).
    big_enough = x.size * itemsize >= (4 << 20)
    if not (big_enough or force_pallas):
        return channel_shuffle_ref(x, groups)

    budget = _vmem_budget_bytes()
    target = max_tile_bytes if max_tile_bytes is not None else budget // 5
    c_chunk = _pick_c_chunk(cpg, groups, hw, itemsize, target_bytes=target)
    if c_chunk is None:
        # TODO(synk): also split along hw in 128-lane multiples for giant per-group slabs.
        return channel_shuffle_ref(x, groups)
    n_chunks = cpg // c_chunk

    # One grid step reads group-major slabs for channels [i*c_chunk, (i+1)*c_chunk)
    # of every group, interleaves them in VMEM, and writes one contiguous output slab.
    x_view = x.reshape(B, groups, cpg, hw)

    out_view = pl.pallas_call(
        functools.partial(_shuffle_kernel, groups=groups, hw=hw),
        out_shape=jax.ShapeDtypeStruct((B, cpg, groups * hw), x.dtype),
        grid=(B, n_chunks),
        in_specs=[
            # (groups, c_chunk, hw): last two block dims are 8-aligned / full-extent,
            # so no hw%128 requirement; each group's slab is a long contiguous read.
            pl.BlockSpec((None, groups, c_chunk, hw), lambda b, i: (b, 0, i, 0)),
        ],
        # One contiguous (c_chunk, groups*hw) write slab per step (lane-dense,
        # full-extent last dim -> long HBM write bursts on all generations).
        out_specs=pl.BlockSpec((None, c_chunk, groups * hw), lambda b, i: (b, i, 0)),
        compiler_params=pltpu.CompilerParams(
            # Every step is independent: shardable across TCs (matters on v7x).
            dimension_semantics=("parallel", "parallel"),
            vmem_limit_bytes=budget,
        ),
    )(x_view)

    # (B, cpg, groups*hw) -> (B, C, H, W); output channel i*groups + g holds
    # input channel g*cpg + i — exactly the PyTorch Shuffle semantics.
    return out_view.reshape(B, C, H, W)


if __name__ == "__main__":
    key = jax.random.PRNGKey(0)
    k1, k2, k3, k4 = jax.random.split(key, 4)

    # 1) Small NCHW f32, groups=2 (lane-aligned hw=256).
    x1 = jax.random.normal(k1, (2, 4, 16, 16), dtype=jnp.float32)
    o1 = jax.block_until_ready(channel_shuffle(x1, 2, force_pallas=True))
    r1 = channel_shuffle_ref(x1, 2)
    assert o1.shape == r1.shape and o1.dtype == r1.dtype
    assert jnp.array_equal(o1, r1), "mismatch (f32, aligned hw)"

    # 2) bf16, groups=4, hw=512.
    x2 = jax.random.normal(k2, (2, 8, 16, 32), dtype=jnp.bfloat16)
    o2 = jax.block_until_ready(channel_shuffle(x2, 4, force_pallas=True))
    assert jnp.array_equal(o2, channel_shuffle_ref(x2, 4)), "mismatch (bf16)"

    # 3) Realistic ShuffleNet spatial size: hw = 14*14 = 196 (NOT a multiple of
    #    128) — exercises the relaxed gate and unaligned in-VMEM lane stores.
    x3 = jax.random.normal(k3, (2, 16, 14, 14), dtype=jnp.float32)
    o3 = jax.block_until_ready(channel_shuffle(x3, 4, force_pallas=True))
    assert jnp.array_equal(o3, channel_shuffle_ref(x3, 4)), "mismatch (hw=196)"

    # 4) Force multiple channel chunks (n_chunks > 1) via a tiny tile budget to
    #    exercise the chunked index maps.
    x4 = jax.random.normal(k4, (1, 64, 16, 16), dtype=jnp.float32)
    o4 = jax.block_until_ready(
        channel_shuffle(x4, 2, force_pallas=True, max_tile_bytes=16 * 1024))
    assert jnp.array_equal(o4, channel_shuffle_ref(x4, 2)), "mismatch (chunked)"

    print("KERNEL_OK")
</pallas_src>

<mosaic_0001>
module attributes {stable_mosaic.version = 11 : i64} {
  func.func @_shuffle_kernel(%arg0: i32, %arg1: i32, %arg2: memref<1x2x2x256xf32, #tpu.memory_space<vmem>>, %arg3: memref<1x2x512xf32, #tpu.memory_space<vmem>>) attributes {dimension_semantics = [#tpu.dimension_semantics<parallel>, #tpu.dimension_semantics<parallel>], iteration_bounds = array<i64: 2, 1>, scalar_prefetch = 0 : i64, scratch_operands = 0 : i64, tpu.core_type = #tpu.core_type<tc>, window_params = [{transform_indices = @transform_0, window_bounds = array<i64: 1, 2, 2, 256>}, {transform_indices = @transform_1, window_bounds = array<i64: 1, 2, 512>}]} {
    %c0 = arith.constant 0 : index
    %c0_0 = arith.constant 0 : index
    %c0_1 = arith.constant 0 : index
    %c0_2 = arith.constant 0 : index
    %0 = vector.load %arg2[%c0, %c0_0, %c0_1, %c0_2] : memref<1x2x2x256xf32, #tpu.memory_space<vmem>>, vector<1x1x2x256xf32>
    %1 = vector.shape_cast %0 : vector<1x1x2x256xf32> to vector<2x256xf32>
    %c0_3 = arith.constant 0 : index
    %c0_4 = arith.constant 0 : index
    %c0_5 = arith.constant 0 : index
    %2 = vector.load %arg3[%c0_3, %c0_4, %c0_5] : memref<1x2x512xf32, #tpu.memory_space<vmem>>, vector<1x2x256xf32>
    %3 = vector.shape_cast %2 : vector<1x2x256xf32> to vector<2x256xf32>
    %4 = vector.shape_cast %1 : vector<2x256xf32> to vector<1x2x256xf32>
    tpu.vector_store %arg3[%c0_3, %c0_4, %c0_5], %4 {strides = array<i32>} : memref<1x2x512xf32, #tpu.memory_space<vmem>>, vector<1x2x256xf32>,
    %c0_6 = arith.constant 0 : index
    %c1 = arith.constant 1 : index
    %c0_7 = arith.constant 0 : index
    %c0_8 = arith.constant 0 : index
    %5 = vector.load %arg2[%c0_6, %c1, %c0_7, %c0_8] : memref<1x2x2x256xf32, #tpu.memory_space<vmem>>, vector<1x1x2x256xf32>
    %6 = vector.shape_cast %5 : vector<1x1x2x256xf32> to vector<2x256xf32>
    %c0_9 = arith.constant 0 : index
    %c0_10 = arith.constant 0 : index
    %c256 = arith.constant 256 : index
    %7 = vector.load %arg3[%c0_9, %c0_10, %c256] : memref<1x2x512xf32, #tpu.memory_space<vmem>>, vector<1x2x256xf32>
    %8 = vector.shape_cast %7 : vector<1x2x256xf32> to vector<2x256xf32>
    %9 = vector.shape_cast %6 : vector<2x256xf32> to vector<1x2x256xf32>
    tpu.vector_store %arg3[%c0_9, %c0_10, %c256], %9 {strides = array<i32>} : memref<1x2x512xf32, #tpu.memory_space<vmem>>, vector<1x2x256xf32>,
    return
  }
  func.func @transform_0(%arg0: i32, %arg1: i32) -> (i32, i32, i32, i32) {
    %c0_i32 = arith.constant 0 : i32
    %c0_i32_0 = arith.constant 0 : i32
    %c0_i32_1 = arith.constant 0 : i32
    return %arg0, %c0_i32, %arg1, %c0_i32_0 : i32, i32, i32, i32
  }
  func.func @transform_1(%arg0: i32, %arg1: i32) -> (i32, i32, i32) {
    %c0_i32 = arith.constant 0 : i32
    %c0_i32_0 = arith.constant 0 : i32
    return %arg0, %arg1, %c0_i32 : i32, i32, i32
  }
}

</mosaic_0001>

<llo_original>
// kernel: tpu_custom_call.1
$region0: #{tpu_custom_call.1}
  #allocation0 [shape = 'u32[]', space=smem, size = 0x4, offset = 0x4, fixed_abs, tag = 'smem constant byte address 0x4 - core index']
  #allocation1 [shape = 'u32[144,128]{1,0:T(1,128)}', space=vmem, size = 0x12000, scoped, tag = 'internal scratch']
  %s0 = inlined_call_operand.hbm [shape: f32[2,2,2,256], index: 0, kind: input, shape index: {}]
  %s1 = inlined_call_operand.hbm [shape: f32[2,2,512], index: 1, kind: output, shape index: {}]
  %s2 = sld [smem:[#allocation0]]
  $region41: #{tpu_custom_call.1} parent=0
    _
  %s4 = ssub.s32 1, %s2
  %s5 = scalar_select 0, %s4, %s2
  $region1: #{tpu_custom_call.1} parent=0
    #allocation2 [shape = 'u8[8192]{0}', space=vmem, size = 0x2000, scoped, tag = 'input window, operand 0']
    #allocation3 [shape = 's32[2]{0}', space=sflag, size = 0x8, scoped, tag = 'scoped memory for tpu_custom_call.1']
    #allocation4 [shape = 's32[2]{0}', space=sflag, size = 0x8, scoped, tag = 'scoped memory for tpu_custom_call.1']
    #allocation5 [shape = 'u8[8192]{0}', space=vmem, size = 0x2000, scoped, tag = 'output window, operand 0']
    %6 = vsyncpa [#allocation3], 0
    %s7 = scalar_lea.sflag [#allocation3], 1
    %8 = vsyncpa %s7, 0
    %9 = vsyncpa [#allocation4], 0
    %s10 = scalar_lea.sflag [#allocation4], 1
    %11 = vsyncpa %s10, 0
    loop: start=0, step=1, limit=4
    $region2: #{tpu_custom_call.1} parent=1 // loop_pre_header
      _
    $region3: #{tpu_custom_call.1} parent=1 // loop_header
      %s13 = sphi 0, %s17
      %p14 = scmp.ge.s32.totalorder %s13, 4
      %s20 = sphi 0, %s32
      %s21 = sphi 0, %s28
      %s22 = sphi 0, %s20
      %s23 = sphi 0, %s21
      %s24 = sphi 0, %s22
      %s25 = sphi 0, %s23
      %s37 = sphi 0, %s39
      %s40 = sphi 0, %s37
      %s41 = sphi 0, %s40
      %s57 = sphi 0, %s41
      %s65 = sphi 0, %s67
      %s68 = sphi 0, %s65
      %s69 = sphi 0, %s68
      %s85 = sphi 0, %s69
    $region4: #{tpu_custom_call.1} parent=1 // loop_header_branch
      %16 = sbr.rel (%p14) target = $region8
    $region5: #{tpu_custom_call.1} parent=1 // loop_body
      %s18 = ssub.s32 %s13, 1
      %s19 = ssub.s32 %s13, 2
      %s26 = sadd.s32 1, %s21
      %p27 = scmp.ge.s32.totalorder %s26, 1
      %s28 = scalar_select %p27, 0, %s26
      %s29 = sadd.s32 1, %s20
      %s30 = scalar_select %p27, %s29, %s20
      %p31 = scmp.ge.s32.totalorder %s30, 2
      %s32 = scalar_select %p31, 0, %s30
      %s33 = ssub.s32 %s20, %s32
      %s34 = ssub.s32 %s21, %s28
      %s35 = sor.u32 %s33, %s34
      %p36 = scmp.eq.s32.totalorder %s35, 0
      %s38 = sadd.s32 %s37, 1
      %s39 = scalar_select %p36, %s37, %s38
      %p42 = pneg %p36
      %p43 = scmp.eq.s32.totalorder %s13, 1
      %p44 = por %p42, %p43
      %p45 = scmp.ne.s32.totalorder %s37, %s40
      %p46 = scmp.eq.s32.totalorder %s13, 0
      %p47 = por %p45, %p46
      %p48 = scmp.ne.s32.totalorder %s37, %s40
      %p49 = scmp.eq.s32.totalorder %s18, 1
      %p50 = por %p48, %p49
      %p51 = scmp.ne.s32.totalorder %s40, %s41
      %p52 = scmp.eq.s32.totalorder %s18, 0
      %p53 = por %p51, %p52
      %p54 = scmp.ne.s32.totalorder %s40, %s41
      %p55 = scmp.eq.s32.totalorder %s19, 1
      %p56 = por %p54, %p55
      %p58 = scmp.ne.s32.totalorder %s41, %s57
      %p59 = scmp.eq.s32.totalorder %s19, 0
      %p60 = por %p58, %p59
      %s61 = ssub.s32 %s20, %s32
      %s62 = ssub.s32 %s21, %s28
      %s63 = sor.u32 %s61, %s62
      %p64 = scmp.eq.s32.totalorder %s63, 0
      %s66 = sadd.s32 %s65, 1
      %s67 = scalar_select %p64, %s65, %s66
      %p70 = pneg %p64
      %p71 = scmp.eq.s32.totalorder %s13, 1
      %p72 = por %p70, %p71
      %p73 = scmp.ne.s32.totalorder %s65, %s68
      %p74 = scmp.eq.s32.totalorder %s13, 0
      %p75 = por %p73, %p74
      %p76 = scmp.ne.s32.totalorder %s65, %s68
      %p77 = scmp.eq.s32.totalorder %s18, 1
      %p78 = por %p76, %p77
      %p79 = scmp.ne.s32.totalorder %s68, %s69
      %p80 = scmp.eq.s32.totalorder %s18, 0
      %p81 = por %p79, %p80
      %p82 = scmp.ne.s32.totalorder %s68, %s69
      %p83 = scmp.eq.s32.totalorder %s19, 1
      %p84 = por %p82, %p83
      %p86 = scmp.ne.s32.totalorder %s69, %s85
      %p87 = scmp.eq.s32.totalorder %s19, 0
      %p88 = por %p86, %p87
      %p89 = scmp.le.s32.totalorder 1, %s13
      %p90 = scmp.lt.s32.totalorder %s13, 3
      %p91 = pnand %p89, %p90
      %p92 = pneg %p91
      // Predicated region
      $region9: #{tpu_custom_call.1} parent=5 // pred_check
        _
      $region10: #{tpu_custom_call.1} parent=5 // pred_check_branch
        %94 = sbr.rel (%p91) target = $region12
      $region11: #{tpu_custom_call.1} parent=5 // pred_region
        %s95 = ssub.s32 %s13, 1
      $region12: #{tpu_custom_call.1} parent=5 // pred_fallthru
        _
      %p96 = scmp.lt.s32.totalorder %s13, 2
      // Predicated region
      $region13: #{tpu_custom_call.1} parent=5 // pred_check
        %p97 = pneg %p96
      $region14: #{tpu_custom_call.1} parent=5 // pred_check_branch
        %99 = sbr.rel (%p97) target = $region16
      $region15: #{tpu_custom_call.1} parent=5 // pred_region
        // Predicated region
        $region17: #{tpu_custom_call.1} parent=15 // pred_check
          %p100 = pneg %p47
        $region18: #{tpu_custom_call.1} parent=15 // pred_check_branch
          %102 = sbr.rel (%p100) target = $region20
        $region19: #{tpu_custom_call.1} parent=15 // pred_region
          %s103 = sand.u32 %s37, 1
          %s104 = scalar_lea.sflag [#allocation3], %s103
          %s105 = sand.u32 %s37, 1
          %s106 = smul.addr %s105, 8
          %s107 = scalar_lea.vmem [#allocation2], %s106
          %s109 = ssub.s32 128, 128
          %110 = vsyncadd %s104, %s109
          %s111 = smul.addr %s21, 2
          %s112 = smul.addr %s20, 4
          %s113 = sadd.s32 %s111, %s112
          %s114 = smul.addr %s113, 32
          %s115 = scalar_lea.hbm %s0, %s114
          %s116 = sshll.u32 %s107, 4
          %s117 = int_to_ptr.vmem [resolvable:$true] %s116
          %122 = dma.hbm_to_vmem [thread:$0]  %s115, 128, %s117, %s104, 64, 64, 4
        $region20: #{tpu_custom_call.1} parent=15 // pred_fallthru
          _
      $region16: #{tpu_custom_call.1} parent=5 // pred_fallthru
        _
      %p123 = scmp.le.s32.totalorder 1, %s13
      %p124 = scmp.lt.s32.totalorder %s13, 3
      %p125 = pnand %p123, %p124
      %p126 = pneg %p125
      // Predicated region
      $region21: #{tpu_custom_call.1} parent=5 // pred_check
        _
      $region22: #{tpu_custom_call.1} parent=5 // pred_check_branch
        %128 = sbr.rel (%p125) target = $region24
      $region23: #{tpu_custom_call.1} parent=5 // pred_region
        %s129 = ssub.s32 %s13, 1
        %s130 = sand.u32 %s40, 1
        %s131 = scalar_lea.sflag [#allocation3], %s130
        %s132 = sand.u32 %s40, 1
        %s133 = smul.addr %s132, 8
        %s134 = scalar_lea.vmem [#allocation2], %s133
        // Predicated region
        $region25: #{tpu_custom_call.1} parent=23 // pred_check
          %p135 = pneg %p53
        $region26: #{tpu_custom_call.1} parent=23 // pred_check_branch
          %137 = sbr.rel (%p135) target = $region28
        $region27: #{tpu_custom_call.1} parent=23 // pred_region
          %138 = dma.done %s131, 128
        $region28: #{tpu_custom_call.1} parent=23 // pred_fallthru
          _
        %s139 = sand.u32 %s40, 1
        %s140 = scalar_lea.sflag [#allocation3], %s139
        %s141 = sand.u32 %s40, 1
        %s142 = smul.addr %s141, 8
        %s143 = scalar_lea.vmem [#allocation2], %s142
        %p144 = pneg %p53
        %p145 = pneg %p50
        %p146 = pneg %p81
        %p147 = pneg %p78
        %s148 = sand.u32 %s68, 1
        %s149 = scalar_lea.sflag [#allocation4], %s148
        %s150 = sand.u32 %s68, 1
        %s151 = smul.addr %s150, 8
        %s152 = scalar_lea.vmem [#allocation5], %s151
        %v153 = vld [vmem:[%s134] sm:$0xf]
        %154 = vst [vmem:[%s152] sm:$0xf] %v153
        %s155 = scalar_lea.vmem %s134, 4 [#allocation2]
        %v156 = vld [vmem:[%s155] sm:$0xf]
        %157 = vst [vmem:[%s152 + $0x4] sm:$0xf] %v156
        %s158 = sand.u32 %s68, 1
        %s159 = scalar_lea.sflag [#allocation4], %s158
        %s160 = sand.u32 %s68, 1
        %s161 = smul.addr %s160, 8
        %s162 = scalar_lea.vmem [#allocation5], %s161
        // Predicated region
        $region29: #{tpu_custom_call.1} parent=23 // pred_check
          %p163 = pneg %p78
        $region30: #{tpu_custom_call.1} parent=23 // pred_check_branch
          %165 = sbr.rel (%p163) target = $region32
        $region31: #{tpu_custom_call.1} parent=23 // pred_region
          %s167 = ssub.s32 128, 128
          %168 = vsyncadd %s159, %s167
          %s169 = smul.addr %s23, 4
          %s170 = smul.addr %s22, 4
          %s171 = sadd.s32 %s169, %s170
          %s172 = smul.addr %s171, 32
          %s173 = scalar_lea.hbm %s1, %s172
          %s175 = sshll.u32 %s162, 4
          %s176 = int_to_ptr.vmem [resolvable:$true] %s175
          %178 = dma.vmem_to_hbm [thread:$0]  %s176, 128, %s173, %s159
        $region32: #{tpu_custom_call.1} parent=23 // pred_fallthru
          _
      $region24: #{tpu_custom_call.1} parent=5 // pred_fallthru
        _
      %p179 = scmp.le.s32.totalorder 2, %s13
      // Predicated region
      $region33: #{tpu_custom_call.1} parent=5 // pred_check
        %p180 = pneg %p179
      $region34: #{tpu_custom_call.1} parent=5 // pred_check_branch
        %182 = sbr.rel (%p180) target = $region36
      $region35: #{tpu_custom_call.1} parent=5 // pred_region
        %s183 = ssub.s32 %s13, 2
        // Predicated region
        $region37: #{tpu_custom_call.1} parent=35 // pred_check
          %p184 = pneg %p84
        $region38: #{tpu_custom_call.1} parent=35 // pred_check_branch
          %186 = sbr.rel (%p184) target = $region40
        $region39: #{tpu_custom_call.1} parent=35 // pred_region
          %s187 = sand.u32 %s69, 1
          %s188 = scalar_lea.sflag [#allocation4], %s187
          %s189 = sand.u32 %s69, 1
          %s190 = smul.addr %s189, 8
          %s191 = scalar_lea.vmem [#allocation5], %s190
          %192 = dma.done %s188, 128
        $region40: #{tpu_custom_call.1} parent=35 // pred_fallthru
          _
      $region36: #{tpu_custom_call.1} parent=5 // pred_fallthru
        _
    $region6: #{tpu_custom_call.1} parent=1 // loop_footer
      %s17 = sadd.s32 1, %s13
    $region7: #{tpu_custom_call.1} parent=1 // loop_footer_branch
      %12 = sbr.rel target = $region3
    $region8: #{tpu_custom_call.1} parent=1 // loop_exit
      _
    %193 = vsyncpa [#allocation3], 1
    %s194 = scalar_lea.sflag [#allocation3], 1
    %195 = vsyncpa %s194, 1
    %196 = vsyncpa [#allocation4], 1
    %s197 = scalar_lea.sflag [#allocation4], 1
    %198 = vsyncpa %s197, 1

</llo_original>
